<compile_context>
chip_gen: v7x
topology: tpu7x:2x2x1
jax: 0.10.0
libtpu: 0.0.40
codegen_flags: <defaults>
</compile_context>

<pallas_src>
import jax
import jax.numpy as jnp
from jax.experimental import pallas as pl
from jax.experimental.pallas import tpu as pltpu


# --------------------------------------------------------------------------
# Shared cell math: acc = [x|h] @ [W_i2o | W_i2h] + [b_i2o | b_i2h]
# --------------------------------------------------------------------------
def _cell_math(x, h, wx, wh, b, num_out, out_dtype, hid_dtype):
    acc = (jnp.dot(x.astype(wx.dtype), wx, preferred_element_type=jnp.float32)
           + jnp.dot(h.astype(wh.dtype), wh, preferred_element_type=jnp.float32)
           + b)                                               # [B, O+H], f32
    logits = acc[:, :num_out]                                 # lane-0 aligned
    m = jnp.max(logits, axis=-1, keepdims=True)
    shifted = logits - m
    lse = jnp.log(jnp.sum(jnp.exp(shifted), axis=-1, keepdims=True))
    log_probs = (shifted - lse).astype(out_dtype)
    new_hidden = acc[:, num_out:].astype(hid_dtype)
    return log_probs, new_hidden


def _rnn_step_kernel(x_ref, h_ref, wx_ref, wh_ref, b_ref, out_ref, hid_ref):
    out, hid = _cell_math(x_ref[...], h_ref[...], wx_ref[...], wh_ref[...],
                          b_ref[...], out_ref.shape[-1],
                          out_ref.dtype, hid_ref.dtype)
    out_ref[...] = out
    hid_ref[...] = hid


def _rnn_seq_kernel(x_ref, h0_ref, wx_ref, wh_ref, b_ref,
                    out_ref, hfin_ref, hstate):
    t = pl.program_id(0)

    @pl.when(t == 0)
    def _():
        hstate[...] = h0_ref[...]

    out, hid = _cell_math(x_ref[...], hstate[...], wx_ref[...], wh_ref[...],
                          b_ref[...], out_ref.shape[-1],
                          out_ref.dtype, jnp.float32)
    out_ref[...] = out
    hstate[...] = hid

    @pl.when(t == pl.num_programs(0) - 1)
    def _():
        hfin_ref[...] = hstate[...].astype(hfin_ref.dtype)


# --------------------------------------------------------------------------
# Host-side wrappers
# --------------------------------------------------------------------------
def prep_params(w_i2h, b_i2h, w_i2o, b_i2o, input_size, dtype=jnp.float32):
    """One-time param prep (hoisted out of the per-step forward).

    Fuses the two projections along N as [output | hidden] and splits the
    fused weight along K into W_x ([I, O+H]) and W_h ([H, O+H]) so the kernel
    never materialises a [B, I+H] concat.
    """
    w_fused = jnp.concatenate([w_i2o, w_i2h], axis=1)          # [I+H, O+H]
    b_fused = jnp.concatenate([b_i2o, b_i2h]).reshape(1, -1).astype(jnp.float32)
    w_x = w_fused[:input_size].astype(dtype)                   # [I, O+H]
    w_h = w_fused[input_size:].astype(dtype)                   # [H, O+H]
    return w_x, w_h, b_fused


def _ceil8(n):
    return max(8, -(-n // 8) * 8)


def rnn_step(x, h, w_x, w_h, b_fused):
    """Single RNN step == RNN.forward(input, hidden) -> (log_probs, hidden')."""
    B, I = x.shape
    H = h.shape[1]
    O = b_fused.shape[1] - H

    B_pad = _ceil8(B)
    if B_pad != B:
        x = jnp.pad(x, ((0, B_pad - B), (0, 0)))
        h = jnp.pad(h, ((0, B_pad - B), (0, 0)))

    vmem = pl.BlockSpec(memory_space=pltpu.MemorySpace.VMEM)
    cost = pl.CostEstimate(
        flops=2 * B_pad * (I + H) * (O + H),
        transcendentals=B_pad * (O + 1),
        bytes_accessed=(4 * (x.size + h.size + b_fused.size + B_pad * (O + 2 * H))
                        + w_x.dtype.itemsize * (w_x.size + w_h.size)),
    )

    out, hid = pl.pallas_call(
        _rnn_step_kernel,
        out_shape=(jax.ShapeDtypeStruct((B_pad, O), jnp.float32),
                   jax.ShapeDtypeStruct((B_pad, H), jnp.float32)),
        in_specs=[vmem] * 5,
        out_specs=(vmem, vmem),
        input_output_aliases={1: 1},          # hidden state updated in place
        cost_estimate=cost,
    )(x, h, w_x, w_h, b_fused)
    return out[:B], hid[:B]


def rnn_sequence(xs, h0, w_x, w_h, b_fused):
    """Full-sequence forward with the timestep loop inside the kernel.

    xs: [T, B, I], h0: [B, H] -> (log_probs [T, B, O], final hidden [B, H]).
    Weights/bias stay resident in VMEM (constant index_map); the hidden state
    is carried across grid steps in VMEM scratch.
    """
    T, B, I = xs.shape
    H = h0.shape[1]
    O = b_fused.shape[1] - H

    B_pad = _ceil8(B)
    if B_pad != B:
        xs = jnp.pad(xs, ((0, 0), (0, B_pad - B), (0, 0)))
        h0 = jnp.pad(h0, ((0, B_pad - B), (0, 0)))

    grid_spec = pltpu.PrefetchScalarGridSpec(
        num_scalar_prefetch=0,
        grid=(T,),
        in_specs=[
            pl.BlockSpec((None, B_pad, I), lambda t: (t, 0, 0)),   # x_t streamed
            pl.BlockSpec((B_pad, H), lambda t: (0, 0)),            # h0 (resident)
            pl.BlockSpec((I, O + H), lambda t: (0, 0)),            # W_x (resident)
            pl.BlockSpec((H, O + H), lambda t: (0, 0)),            # W_h (resident)
            pl.BlockSpec((1, O + H), lambda t: (0, 0)),            # bias (resident)
        ],
        out_specs=[
            pl.BlockSpec((None, B_pad, O), lambda t: (t, 0, 0)),   # per-step output
            pl.BlockSpec((B_pad, H), lambda t: (0, 0)),            # final hidden
        ],
        scratch_shapes=[pltpu.VMEM((B_pad, H), jnp.float32)],      # carried hidden
    )
    cost = pl.CostEstimate(
        flops=2 * T * B_pad * (I + H) * (O + H),
        transcendentals=T * B_pad * (O + 1),
        bytes_accessed=(xs.dtype.itemsize * xs.size
                        + w_x.dtype.itemsize * (w_x.size + w_h.size)
                        + 4 * (b_fused.size + T * B_pad * O + 2 * B_pad * H)),
    )

    outs, hfin = pl.pallas_call(
        _rnn_seq_kernel,
        out_shape=(jax.ShapeDtypeStruct((T, B_pad, O), jnp.float32),
                   jax.ShapeDtypeStruct((B_pad, H), jnp.float32)),
        grid_spec=grid_spec,
        compiler_params=pltpu.CompilerParams(dimension_semantics=("arbitrary",)),
        cost_estimate=cost,
    )(xs, h0, w_x, w_h, b_fused)
    return outs[:, :B], hfin[:B]


def init_params(key, input_size, hidden_size, output_size):
    """PyTorch-Linear-style init, stored as [in_features, out_features]."""
    k1, k2, k3, k4 = jax.random.split(key, 4)
    fan_in = input_size + hidden_size
    bound = 1.0 / (fan_in ** 0.5)
    w_i2h = jax.random.uniform(k1, (fan_in, hidden_size), jnp.float32, -bound, bound)
    b_i2h = jax.random.uniform(k2, (hidden_size,), jnp.float32, -bound, bound)
    w_i2o = jax.random.uniform(k3, (fan_in, output_size), jnp.float32, -bound, bound)
    b_i2o = jax.random.uniform(k4, (output_size,), jnp.float32, -bound, bound)
    return w_i2h, b_i2h, w_i2o, b_i2o


if __name__ == "__main__":
    input_size, hidden_size, output_size = 16, 32, 8
    batch, seq_len = 8, 8

    key = jax.random.PRNGKey(0)
    kx, kxs, kp = jax.random.split(key, 3)

    w_i2h, b_i2h, w_i2o, b_i2o = init_params(kp, input_size, hidden_size, output_size)
    # One-time, hoisted prep (use dtype=jnp.bfloat16 on v6e/v7x; f32 here for a
    # tight numerical check).
    w_x, w_h, b_fused = prep_params(w_i2h, b_i2h, w_i2o, b_i2o, input_size)

    # ---------------- single step (== RNN.forward) ----------------
    x = jax.random.normal(kx, (batch, input_size), jnp.float32)
    h0 = jnp.zeros((batch, hidden_size), jnp.float32)   # init_hidden() per batch row

    out, h1 = jax.jit(rnn_step)(x, h0, w_x, w_h, b_fused)
    jax.block_until_ready((out, h1))

    combined = jnp.concatenate([x, h0], axis=1)
    ref_h = combined @ w_i2h + b_i2h
    ref_out = jax.nn.log_softmax(combined @ w_i2o + b_i2o, axis=1)
    assert out.shape == (batch, output_size) and h1.shape == (batch, hidden_size)
    assert jnp.allclose(out, ref_out, atol=5e-3), "single-step output mismatch"
    assert jnp.allclose(h1, ref_h, atol=5e-3), "single-step hidden mismatch"

    # ---------------- full sequence (time loop in-kernel) ----------------
    xs = jax.random.normal(kxs, (seq_len, batch, input_size), jnp.float32)
    outs, h_final = jax.jit(rnn_sequence)(xs, h0, w_x, w_h, b_fused)
    jax.block_until_ready((outs, h_final))

    def ref_step(h, x_t):
        c = jnp.concatenate([x_t, h], axis=1)
        h_new = c @ w_i2h + b_i2h
        o = jax.nn.log_softmax(c @ w_i2o + b_i2o, axis=1)
        return h_new, o

    ref_hT, ref_outs = jax.lax.scan(ref_step, h0, xs)
    assert outs.shape == (seq_len, batch, output_size)
    assert h_final.shape == (batch, hidden_size)
    assert jnp.allclose(outs, ref_outs, atol=5e-3), "sequence output mismatch"
    assert jnp.allclose(h_final, ref_hT, atol=5e-3), "sequence hidden mismatch"

    print("KERNEL_OK")
</pallas_src>

<mosaic_0001>
module attributes {stable_mosaic.version = 11 : i64} {
  func.func @_rnn_step_kernel(%arg0: memref<8x16xf32, #tpu.memory_space<vmem>>, %arg1: memref<8x32xf32, #tpu.memory_space<vmem>>, %arg2: memref<16x40xf32, #tpu.memory_space<vmem>>, %arg3: memref<32x40xf32, #tpu.memory_space<vmem>>, %arg4: memref<1x40xf32, #tpu.memory_space<vmem>>, %arg5: memref<8x8xf32, #tpu.memory_space<vmem>>, %arg6: memref<8x32xf32, #tpu.memory_space<vmem>>) attributes {dimension_semantics = [], scalar_prefetch = 0 : i64, scratch_operands = 0 : i64, tpu.core_type = #tpu.core_type<tc>} {
    %c0 = arith.constant 0 : index
    %c0_0 = arith.constant 0 : index
    %0 = vector.load %arg0[%c0, %c0_0] : memref<8x16xf32, #tpu.memory_space<vmem>>, vector<8x16xf32>
    %c0_1 = arith.constant 0 : index
    %c0_2 = arith.constant 0 : index
    %1 = vector.load %arg1[%c0_1, %c0_2] : memref<8x32xf32, #tpu.memory_space<vmem>>, vector<8x32xf32>
    %c0_3 = arith.constant 0 : index
    %c0_4 = arith.constant 0 : index
    %2 = vector.load %arg2[%c0_3, %c0_4] : memref<16x40xf32, #tpu.memory_space<vmem>>, vector<16x40xf32>
    %c0_5 = arith.constant 0 : index
    %c0_6 = arith.constant 0 : index
    %3 = vector.load %arg3[%c0_5, %c0_6] : memref<32x40xf32, #tpu.memory_space<vmem>>, vector<32x40xf32>
    %c0_7 = arith.constant 0 : index
    %c0_8 = arith.constant 0 : index
    %4 = vector.load %arg4[%c0_7, %c0_8] : memref<1x40xf32, #tpu.memory_space<vmem>>, vector<1x40xf32>
    %cst = arith.constant dense<0.000000e+00> : vector<8x40xf32>
    %5 = tpu.matmul %0, %2, %cst {dimension_numbers = #tpu.dot_dimension_numbers<[1], [0], [0], [1], [0, 0, 1, 1], [], []>} : vector<8x16xf32>, vector<16x40xf32>, vector<8x40xf32> -> vector<8x40xf32>
    %cst_9 = arith.constant dense<0.000000e+00> : vector<8x40xf32>
    %6 = tpu.matmul %1, %3, %cst_9 {dimension_numbers = #tpu.dot_dimension_numbers<[1], [0], [0], [1], [0, 0, 1, 1], [], []>} : vector<8x32xf32>, vector<32x40xf32>, vector<8x40xf32> -> vector<8x40xf32>
    %7 = arith.addf %5, %6 : vector<8x40xf32>
    %8 = vector.broadcast %4 : vector<1x40xf32> to vector<8x40xf32>
    %9 = arith.addf %7, %8 : vector<8x40xf32>
    %10 = vector.extract_strided_slice %9 {offsets = [0, 0], sizes = [8, 8], strides = [1, 1]} : vector<8x40xf32> to vector<8x8xf32>
    %cst_10 = arith.constant dense<0xFF800000> : vector<8xf32>
    %11 = vector.multi_reduction <maximumf>, %10, %cst_10 [1] : vector<8x8xf32> to vector<8xf32>
    %12 = vector.shape_cast %11 : vector<8xf32> to vector<8x1xf32>
    %13 = vector.broadcast %12 : vector<8x1xf32> to vector<8x8xf32>
    %14 = arith.subf %10, %13 : vector<8x8xf32>
    %15 = math.exp %14 : vector<8x8xf32>
    %cst_11 = arith.constant dense<0.000000e+00> : vector<8xf32>
    %16 = vector.multi_reduction <add>, %15, %cst_11 [1] : vector<8x8xf32> to vector<8xf32>
    %17 = vector.shape_cast %16 : vector<8xf32> to vector<8x1xf32>
    %18 = math.log %17 : vector<8x1xf32>
    %19 = vector.broadcast %18 : vector<8x1xf32> to vector<8x8xf32>
    %20 = arith.subf %14, %19 : vector<8x8xf32>
    %21 = vector.extract_strided_slice %9 {offsets = [0, 8], sizes = [8, 32], strides = [1, 1]} : vector<8x40xf32> to vector<8x32xf32>
    %c0_12 = arith.constant 0 : index
    %c0_13 = arith.constant 0 : index
    %22 = vector.load %arg5[%c0_12, %c0_13] : memref<8x8xf32, #tpu.memory_space<vmem>>, vector<8x8xf32>
    tpu.vector_store %arg5[%c0_12, %c0_13], %20 {strides = array<i32>} : memref<8x8xf32, #tpu.memory_space<vmem>>, vector<8x8xf32>,
    %c0_14 = arith.constant 0 : index
    %c0_15 = arith.constant 0 : index
    %23 = vector.load %arg6[%c0_14, %c0_15] : memref<8x32xf32, #tpu.memory_space<vmem>>, vector<8x32xf32>
    tpu.vector_store %arg6[%c0_14, %c0_15], %21 {strides = array<i32>} : memref<8x32xf32, #tpu.memory_space<vmem>>, vector<8x32xf32>,
    return
  }
}

</mosaic_0001>

<llo_original>
// kernel: rnn_step.1
$region0: #{rnn_step.1}
  #allocation0 [shape = 'u32[]', space=smem, size = 0x4, offset = 0x4, fixed_abs, tag = 'smem constant byte address 0x4 - core index']
  #allocation1 [shape = 'u32[144,128]{1,0:T(1,128)}', space=vmem, size = 0x12000, scoped, tag = 'internal scratch']
  %s0 = inlined_call_operand.hbm [shape: f32[8,16], index: 0, kind: input, shape index: {}]
  %s1 = inlined_call_operand.hbm [shape: f32[8,32], index: 1, kind: input, shape index: {}, may-alias: {1,6}]
  %s2 = inlined_call_operand.vmem [shape: f32[16,40], index: 2, kind: input, shape index: {}]
  %s3 = inlined_call_operand.hbm [shape: f32[32,40], index: 3, kind: input, shape index: {}]
  %s4 = inlined_call_operand.vmem [shape: f32[1,40], index: 4, kind: input, shape index: {}]
  %s5 = inlined_call_operand.hbm [shape: f32[8,8], index: 5, kind: output, shape index: {0}]
  %s6 = inlined_call_operand.hbm [shape: f32[8,32], index: 6, kind: output, shape index: {1}, may-alias: {1,6}]
  %7 = xla_tuple %s5, %s6
  %s8 = sld [smem:[#allocation0]]
  $region50: #{rnn_step.1} parent=0
    _
  %s10 = ssub.s32 1, %s8
  %s11 = scalar_select 0, %s10, %s8
  $region1: #{rnn_step.1} parent=0
    #allocation2 [shape = 'u8[4096]{0}', space=vmem, size = 0x1000, scoped, tag = 'input window, operand 0, single buffered']
    #allocation3 [shape = 's32[1]{0}', space=sflag, size = 0x4, scoped, tag = 'scoped memory for rnn_step.1']
    #allocation4 [shape = 's32[1]{0}', space=sflag, size = 0x4, scoped, tag = 'scoped memory for rnn_step.1']
    #allocation5 [shape = 'u8[4096]{0}', space=vmem, size = 0x1000, scoped, tag = 'input window, operand 1, single buffered']
    #allocation6 [shape = 's32[1]{0}', space=sflag, size = 0x4, scoped, tag = 'scoped memory for rnn_step.1']
    #allocation7 [shape = 'u8[16384]{0}', space=vmem, size = 0x4000, scoped, tag = 'input window, operand 3, single buffered']
    #allocation8 [shape = 'u8[4096]{0}', space=vmem, size = 0x1000, scoped, tag = 'output window, operand 0, single buffered']
    #allocation9 [shape = 'u8[4096]{0}', space=vmem, size = 0x1000, scoped, tag = 'output window, operand 1, single buffered']
    #allocation10 [shape = 's32[1]{0}', space=sflag, size = 0x4, scoped, tag = 'scoped memory for rnn_step.1']
    %12 = vsyncpa [#allocation3], 0
    %13 = vsyncpa [#allocation6], 0
    %14 = vsyncpa [#allocation4], 0
    %15 = vsyncpa [#allocation10], 0
    // Predicated region
    $region2: #{rnn_step.1} parent=1 // pred_check
      _
    $region3: #{rnn_step.1} parent=1 // pred_check_branch
      %17 = sbr.rel (0) target = $region5
    $region4: #{rnn_step.1} parent=1 // pred_region
      %s19 = ssub.s32 128, 128
      %20 = vsyncadd [#allocation3], %s19
      %s22 = sshll.u32 [#allocation2], 4
      %s23 = int_to_ptr.vmem [resolvable:$true] %s22
      %25 = dma.hbm_to_vmem [thread:$0]  %s0, 128, %s23, [#allocation3]
    $region5: #{rnn_step.1} parent=1 // pred_fallthru
      _
    // Predicated region
    $region6: #{rnn_step.1} parent=1 // pred_check
      _
    $region7: #{rnn_step.1} parent=1 // pred_check_branch
      %27 = sbr.rel (0) target = $region9
    $region8: #{rnn_step.1} parent=1 // pred_region
      %s29 = ssub.s32 128, 128
      %30 = vsyncadd [#allocation6], %s29
      %s32 = sshll.u32 [#allocation5], 4
      %s33 = int_to_ptr.vmem [resolvable:$true] %s32
      %35 = dma.hbm_to_vmem [thread:$0]  %s1, 128, %s33, [#allocation6]
    $region9: #{rnn_step.1} parent=1 // pred_fallthru
      _
    // Predicated region
    $region10: #{rnn_step.1} parent=1 // pred_check
      _
    $region11: #{rnn_step.1} parent=1 // pred_check_branch
      %37 = sbr.rel (0) target = $region13
    $region12: #{rnn_step.1} parent=1 // pred_region
      _
    $region13: #{rnn_step.1} parent=1 // pred_fallthru
      _
    // Predicated region
    $region14: #{rnn_step.1} parent=1 // pred_check
      _
    $region15: #{rnn_step.1} parent=1 // pred_check_branch
      %39 = sbr.rel (0) target = $region17
    $region16: #{rnn_step.1} parent=1 // pred_region
      %s41 = ssub.s32 512, 512
      %42 = vsyncadd [#allocation6], %s41
      %s43 = sshll.u32 [#allocation7], 4
      %s44 = int_to_ptr.vmem [resolvable:$true] %s43
      %49 = dma.hbm_to_vmem [thread:$0]  %s3, 512, %s44, [#allocation6], 128, 128, 8
    $region17: #{rnn_step.1} parent=1 // pred_fallthru
      _
    // Predicated region
    $region18: #{rnn_step.1} parent=1 // pred_check
      _
    $region19: #{rnn_step.1} parent=1 // pred_check_branch
      %51 = sbr.rel (0) target = $region21
    $region20: #{rnn_step.1} parent=1 // pred_region
      _
    $region21: #{rnn_step.1} parent=1 // pred_fallthru
      _
    // Predicated region
    $region22: #{rnn_step.1} parent=1 // pred_check
      _
    $region23: #{rnn_step.1} parent=1 // pred_check_branch
      %53 = sbr.rel (0) target = $region25
    $region24: #{rnn_step.1} parent=1 // pred_region
      %54 = dma.done [#allocation3], 128
    $region25: #{rnn_step.1} parent=1 // pred_fallthru
      _
    // Predicated region
    $region26: #{rnn_step.1} parent=1 // pred_check
      _
    $region27: #{rnn_step.1} parent=1 // pred_check_branch
      %56 = sbr.rel (0) target = $region29
    $region28: #{rnn_step.1} parent=1 // pred_region
      %57 = dma.done [#allocation6], 128
    $region29: #{rnn_step.1} parent=1 // pred_fallthru
      _
    // Predicated region
    $region30: #{rnn_step.1} parent=1 // pred_check
      _
    $region31: #{rnn_step.1} parent=1 // pred_check_branch
      %59 = sbr.rel (0) target = $region33
    $region32: #{rnn_step.1} parent=1 // pred_region
      %60 = dma.done [#allocation6], 512
    $region33: #{rnn_step.1} parent=1 // pred_fallthru
      _
    %v61 = vld [vmem:[#allocation2] sm:$0xff]
    %v62 = vld [vmem:[#allocation5] sm:$0xff]
    %v63 = vld [vmem:[%s2] sm:$0xff]
    %v64 = vld [vmem:[%s2 + $0x8] sm:$0xff]
    %v65 = vld [vmem:[#allocation7] sm:$0xff]
    %v66 = vld [vmem:[#allocation7 + $0x8] sm:$0xff]
    %v67 = vld [vmem:[#allocation7 + $0x10] sm:$0xff]
    %v68 = vld [vmem:[#allocation7 + $0x18] sm:$0xff]
    %v69 = vld [vmem:[%s4] sm:$0x1]
    %vm70 = vcmask 261120
    %v72 = vsel %vm70, %v62, 0
    %74 = vmatprep.subr.mxu0 0.0
    %75 = vmatpush1.msra.mxu0 %v65
    %76 = vmatprep.subr.mxu0 0.0
    %77 = vmatpush1.msra.mxu0 %v66
    %78 = vmatprep.subr.mxu0 0.0
    %79 = vmatpush1.msra.mxu0 %v67
    %80 = vmatprep.subr.mxu0 0.0
    %81 = vmatpush1.msra.mxu0 %v68
    %82 = vmatprep.subr.mxu0 0.0
    %83 = vmatpush1.msra.mxu0 0.0
    %84 = vmatprep.subr.mxu0 0.0
    %85 = vmatpush1.msra.mxu0 0.0
    %86 = vmatprep.subr.mxu0 0.0
    %87 = vmatpush1.msra.mxu0 0.0
    %88 = vmatprep.subr.mxu0 0.0
    %89 = vmatpush1.msra.mxu0 0.0
    %90 = vmatprep.subr.mxu0 0.0
    %91 = vmatpush1.msra.mxu0 0.0
    %92 = vmatprep.subr.mxu0 0.0
    %93 = vmatpush1.msra.mxu0 0.0
    %94 = vmatprep.subr.mxu0 0.0
    %95 = vmatpush1.msra.mxu0 0.0
    %96 = vmatprep.subr.mxu0 0.0
    %97 = vmatpush1.msra.mxu0 0.0
    %98 = vmatprep.subr.mxu0 0.0
    %99 = vmatpush1.msra.mxu0 0.0
    %100 = vmatprep.subr.mxu0 0.0
    %101 = vmatpush1.msra.mxu0 0.0
    %102 = vmatprep.subr.mxu0 0.0
    %103 = vmatpush1.msra.mxu0 0.0
    %104 = vmatprep.subr.mxu0 0.0
    %105 = vmatpush1.msra.mxu0 0.0
    %106 = vmatprep.subr.mxu0 0.0
    %107 = vmatpush1.msra.mxu0 0.0
    %108 = vmatprep.subr.mxu0 0.0
    %109 = vmatpush1.msra.mxu0 0.0
    %110 = vmatprep.subr.mxu0 0.0
    %111 = vmatpush1.msra.mxu0 0.0
    %112 = vmatprep.subr.mxu0 0.0
    %113 = vmatpush1.msra.mxu0 0.0
    %114 = vmatprep.subr.mxu0 0.0
    %115 = vmatpush1.msra.mxu0 0.0
    %116 = vmatprep.subr.mxu0 0.0
    %117 = vmatpush1.msra.mxu0 0.0
    %118 = vmatprep.subr.mxu0 0.0
    %119 = vmatpush1.msra.mxu0 0.0
    %120 = vmatprep.subr.mxu0 0.0
    %121 = vmatpush1.msra.mxu0 0.0
    %122 = vmatprep.subr.mxu0 0.0
    %123 = vmatpush1.msra.mxu0 0.0
    %124 = vmatprep.subr.mxu0 0.0
    %125 = vmatpush1.msra.mxu0 0.0
    %126 = vmatprep.subr.mxu0 0.0
    %127 = vmatpush1.msra.mxu0 0.0
    %128 = vmatprep.subr.mxu0 0.0
    %129 = vmatpush1.msra.mxu0 0.0
    %130 = vmatprep.subr.mxu0 0.0
    %131 = vmatpush1.msra.mxu0 0.0
    %132 = vmatprep.subr.mxu0 0.0
    %133 = vmatpush1.msra.mxu0 0.0
    %134 = vmatprep.subr.mxu0 0.0
    %135 = vmatpush1.msra.mxu0 0.0
    %136 = vmatprep.subr.mxu0 0.0
    %137 = vmatpush1.msra.mxu0 0.0
    %138 = vmatprep.mubr.f32.mxu0 0.0
    %139 = vmatmul.mubr.f32.gmra.mrb[0].mxu0 %v72
    %v140 = vpop.f32.mrb[0].mxu0
    %v141 = vadd.f32 0.0, %v140
    %v142 = vpop.f32.mrb[0].mxu0
    %143 = vdwg.mxu0
    %vm144 = vcmask 130048
    %v146 = vsel %vm144, %v61, 0
    %148 = vmatprep.subr.mxu0 0.0
    %149 = vmatpush1.msra.mxu0 %v63
    %150 = vmatprep.subr.mxu0 0.0
    %151 = vmatpush1.msra.mxu0 %v64
    %152 = vmatprep.subr.mxu0 0.0
    %153 = vmatpush1.msra.mxu0 0.0
    %154 = vmatprep.subr.mxu0 0.0
    %155 = vmatpush1.msra.mxu0 0.0
    %156 = vmatprep.subr.mxu0 0.0
    %157 = vmatpush1.msra.mxu0 0.0
    %158 = vmatprep.subr.mxu0 0.0
    %159 = vmatpush1.msra.mxu0 0.0
    %160 = vmatprep.subr.mxu0 0.0
    %161 = vmatpush1.msra.mxu0 0.0
    %162 = vmatprep.subr.mxu0 0.0
    %163 = vmatpush1.msra.mxu0 0.0
    %164 = vmatprep.subr.mxu0 0.0
    %165 = vmatpush1.msra.mxu0 0.0
    %166 = vmatprep.subr.mxu0 0.0
    %167 = vmatpush1.msra.mxu0 0.0
    %168 = vmatprep.subr.mxu0 0.0
    %169 = vmatpush1.msra.mxu0 0.0
    %170 = vmatprep.subr.mxu0 0.0
    %171 = vmatpush1.msra.mxu0 0.0
    %172 = vmatprep.subr.mxu0 0.0
    %173 = vmatpush1.msra.mxu0 0.0
    %174 = vmatprep.subr.mxu0 0.0
    %175 = vmatpush1.msra.mxu0 0.0
    %176 = vmatprep.subr.mxu0 0.0
    %177 = vmatpush1.msra.mxu0 0.0
    %178 = vmatprep.subr.mxu0 0.0
    %179 = vmatpush1.msra.mxu0 0.0
    %180 = vmatprep.subr.mxu0 0.0
    %181 = vmatpush1.msra.mxu0 0.0
    %182 = vmatprep.subr.mxu0 0.0
    %183 = vmatpush1.msra.mxu0 0.0
    %184 = vmatprep.subr.mxu0 0.0
    %185 = vmatpush1.msra.mxu0 0.0
    %186 = vmatprep.subr.mxu0 0.0
    %187 = vmatpush1.msra.mxu0 0.0
    %188 = vmatprep.subr.mxu0 0.0
    %189 = vmatpush1.msra.mxu0 0.0
    %190 = vmatprep.subr.mxu0 0.0
    %191 = vmatpush1.msra.mxu0 0.0
    %192 = vmatprep.subr.mxu0 0.0
    %193 = vmatpush1.msra.mxu0 0.0
    %194 = vmatprep.subr.mxu0 0.0
    %195 = vmatpush1.msra.mxu0 0.0
    %196 = vmatprep.subr.mxu0 0.0
    %197 = vmatpush1.msra.mxu0 0.0
    %198 = vmatprep.subr.mxu0 0.0
    %199 = vmatpush1.msra.mxu0 0.0
    %200 = vmatprep.subr.mxu0 0.0
    %201 = vmatpush1.msra.mxu0 0.0
    %202 = vmatprep.subr.mxu0 0.0
    %203 = vmatpush1.msra.mxu0 0.0
    %204 = vmatprep.subr.mxu0 0.0
    %205 = vmatpush1.msra.mxu0 0.0
    %206 = vmatprep.subr.mxu0 0.0
    %207 = vmatpush1.msra.mxu0 0.0
    %208 = vmatprep.subr.mxu0 0.0
    %209 = vmatpush1.msra.mxu0 0.0
    %210 = vmatprep.subr.mxu0 0.0
    %211 = vmatpush1.msra.mxu0 0.0
    %212 = vmatprep.mubr.f32.mxu0 0.0
    %213 = vmatmul.mubr.f32.gmra.mrb[0].mxu0 %v146
    %v214 = vpop.f32.mrb[0].mxu0
    %v215 = vadd.f32 %v141, %v214
    %v216 = vpop.f32.mrb[0].mxu0
    %217 = vdwg.mxu0
    %v219 = vlaneseq
    %v220 = vshrl.u32 %v219, 7
    %v221 = vsub.s32 0, %v220
    %v222 = vrot.slane %v69, %v221
    %v224 = vadd.f32 %v215, %v222
    %vm225 = vcmask 64512
    %v226 = vsel %vm225, %v224, -inf
    %227 = vmax.xlane.f32.xlu0 %v226
    %v228 = vpop.xlane.xlu0 %227
    %v229 = vsub.f32 %v224, %v228
    %v230 = vmul.f32 %v229, 1.442695
    %v231 = vpow.pop %v230
    %v232 = vsel %vm225, %v231, 0.0
    %233 = vadd.xlane.f32.xlu0 %v232
    %v234 = vpop.xlane.xlu0 %233
    %v235 = vlog2.pop %v234
    %v236 = vmul.f32 %v235, 0.6931472
    %v237 = vsub.f32 %v229, %v236
    %238 = vst.msk [vmem:[#allocation8] sm:$0xff] %vm225, %v237
    %240 = vrot.lane.b32.xlu0 %v224, 120
    %v241 = vpop.permute.xlu0 %240
    %243 = vst.msk [vmem:[#allocation9] sm:$0xff] %vm70, %v241
    // Predicated region
    $region34: #{rnn_step.1} parent=1 // pred_check
      _
    $region35: #{rnn_step.1} parent=1 // pred_check_branch
      %245 = sbr.rel (0) target = $region37
    $region36: #{rnn_step.1} parent=1 // pred_region
      %s247 = ssub.s32 128, 128
      %248 = vsyncadd [#allocation4], %s247
      %s250 = sshll.u32 [#allocation8], 4
      %s251 = int_to_ptr.vmem [resolvable:$true] %s250
      %253 = dma.vmem_to_hbm [thread:$0]  %s251, 128, %s5, [#allocation4]
    $region37: #{rnn_step.1} parent=1 // pred_fallthru
      _
    // Predicated region
    $region38: #{rnn_step.1} parent=1 // pred_check
      _
    $region39: #{rnn_step.1} parent=1 // pred_check_branch
      %255 = sbr.rel (0) target = $region41
    $region40: #{rnn_step.1} parent=1 // pred_region
      %s257 = ssub.s32 128, 128
      %258 = vsyncadd [#allocation10], %s257
      %s260 = sshll.u32 [#allocation9], 4
      %s261 = int_to_ptr.vmem [resolvable:$true] %s260
      %263 = dma.vmem_to_hbm [thread:$0]  %s261, 128, %s6, [#allocation10]
    $region41: #{rnn_step.1} parent=1 // pred_fallthru
      _
    // Predicated region
    $region42: #{rnn_step.1} parent=1 // pred_check
      _
    $region43: #{rnn_step.1} parent=1 // pred_check_branch
      %265 = sbr.rel (0) target = $region45
    $region44: #{rnn_step.1} parent=1 // pred_region
      %266 = dma.done [#allocation4], 128
    $region45: #{rnn_step.1} parent=1 // pred_fallthru
      _
    // Predicated region
    $region46: #{rnn_step.1} parent=1 // pred_check
      _
    $region47: #{rnn_step.1} parent=1 // pred_check_branch
      %268 = sbr.rel (0) target = $region49
    $region48: #{rnn_step.1} parent=1 // pred_region
      %269 = dma.done [#allocation10], 128
    $region49: #{rnn_step.1} parent=1 // pred_fallthru
      _
    %270 = vsyncpa [#allocation3], 1
    %271 = vsyncpa [#allocation6], 1
    %272 = vsyncpa [#allocation4], 1
    %273 = vsyncpa [#allocation10], 1

</llo_original>
